<compile_context>
chip_gen: v6e
topology: v6e:2x2x1
jax: 0.10.0
libtpu: 0.0.40
codegen_flags: <defaults>
</compile_context>

<pallas_src>
import functools

import jax
import jax.numpy as jnp
from jax import lax
from jax.experimental import pallas as pl
from jax.experimental.pallas import tpu as pltpu


def _round_up(x, m):
    return (x + m - 1) // m * m


# ------------------------------------------------------------------ kernel 1
def _node_proj_kernel(x_ref, w_ref, b_ref, rw_ref, invdeg_ref, h_ref, res_ref):
    # h = x @ Wn + bn ;  resid = relu(h + rw) * (1/degs)   (all f32)
    h = jnp.dot(x_ref[...], w_ref[...],
                preferred_element_type=jnp.float32) + b_ref[...]
    h_ref[...] = h
    res_ref[...] = jnp.maximum(h + rw_ref[...], 0.0) * invdeg_ref[...]


# ------------------------------------------------------------------ kernel 2
def _msg_aggregate_kernel(ct_ref, cf_ref, cl_ref, src_ref,        # scalar prefetch
                          hnode_ref, efeat_ref, dstloc_ref, norm_ref,
                          resid_ref, we_ref, be_ref,
                          out_ref,
                          acc_ref, gath_ref, *, compute_dtype):
    c = pl.program_id(0)
    tile_e = gath_ref.shape[0]
    tile_n = acc_ref.shape[0]

    @pl.when(cf_ref[c] == 1)                  # first chunk of this node tile
    def _():
        acc_ref[...] = jnp.zeros_like(acc_ref)

    # ---- gather h_node[src]: 8 rows per iteration -> full 8-sublane stores ----
    e0 = c * tile_e

    def gather8(i, carry):
        base = pl.multiple_of(i * 8, 8)
        rows = [hnode_ref[pl.ds(src_ref[e0 + base + r], 1), :] for r in range(8)]
        gath_ref[pl.ds(base, 8), :] = jnp.concatenate(rows, axis=0)
        return carry

    lax.fori_loop(0, tile_e // 8, gather8, 0)

    # ---- per-edge message: relu(h_node[src] + e @ We + be) * norm   (f32) ----
    h_edge = jnp.dot(efeat_ref[...], we_ref[...],
                     preferred_element_type=jnp.float32) + be_ref[...]
    msg = jnp.maximum(gath_ref[...] + h_edge, 0.0) * norm_ref[...]

    # ---- scatter-add via in-VMEM one-hot @ MXU (f32 accumulation) ------------
    # dst_local in [0, tile_n) for real edges, -1 for padded edges -> zero column
    # (their norm is 0 as well, so they are masked twice).
    row_ids = lax.broadcasted_iota(jnp.int32, (tile_n, tile_e), 0)
    onehot = (row_ids == dstloc_ref[0]).astype(compute_dtype)
    acc_ref[...] += jnp.dot(onehot, msg.astype(compute_dtype),
                            preferred_element_type=jnp.float32)

    @pl.when(cl_ref[c] == 1)                  # last chunk of this node tile
    def _():
        out_ref[...] = (acc_ref[...] + resid_ref[...]).astype(out_ref.dtype)


# ------------------------------------------------------------------ wrapper
def gcn_ogb_layer(node_feats, edge_feats, src, dst, degs, norm,
                  w_node, b_node, w_edge, b_edge, res_weight,
                  *, tile_n=256, tile_e=512, compute_dtype=jnp.bfloat16):
    """node_feats (N, Din_n), edge_feats (E, Din_e), src/dst (E,) int,
    degs (N, 1), norm (E, 1). Returns (N, out_feats) float32.

    Host-side preprocessing (sorting edges by dst, segment bookkeeping) is plain
    eager JAX; the data-dependent chunk count means this wrapper is not jittable
    as a whole, only the pallas_calls are compiled.
    """
    f32 = jnp.float32
    N, din_n = node_feats.shape
    E, din_e = edge_feats.shape
    F = w_node.shape[1]

    f_pad = _round_up(F, 128)
    tile_n = _round_up(min(tile_n, max(N, 8)), 8)
    tile_e = _round_up(min(tile_e, max(E, 128)), 128)
    n_pad = _round_up(N, tile_n)
    n_grid = n_pad // tile_n

    # ---------------- host-side glue (plain JAX) ------------------------------
    node_p = jnp.zeros((n_pad, din_n), f32).at[:N].set(node_feats.astype(f32))
    degs_f = degs.reshape(-1).astype(f32)
    # guard against zero-degree nodes (reference would produce inf there)
    inv_deg = jnp.zeros((n_pad, 1), f32).at[:N, 0].set(
        jnp.where(degs_f > 0, 1.0 / degs_f, 0.0))

    wn = jnp.zeros((din_n, f_pad), f32).at[:, :F].set(w_node.astype(f32))
    bn = jnp.zeros((1, f_pad), f32).at[:, :F].set(b_node.reshape(1, F).astype(f32))
    we = jnp.zeros((din_e, f_pad), f32).at[:, :F].set(w_edge.astype(f32))
    be = jnp.zeros((1, f_pad), f32).at[:, :F].set(b_edge.reshape(1, F).astype(f32))
    rw = jnp.zeros((1, f_pad), f32).at[:, :F].set(res_weight.reshape(1, F).astype(f32))

    # --- dst-sorted edges, bucketed into per-node-tile segments, each segment
    #     padded to a multiple of tile_e (>= 1 chunk per tile so every output
    #     node tile gets written). -------------------------------------------
    src_i = src.astype(jnp.int32)
    dst_i = dst.astype(jnp.int32)
    order = jnp.argsort(dst_i)
    dst_s = dst_i[order]
    src_s = src_i[order]
    edge_s = edge_feats.astype(f32)[order]
    norm_s = norm.reshape(-1).astype(f32)[order]

    tile_bounds = jnp.arange(n_grid + 1, dtype=jnp.int32) * tile_n
    seg_start = jnp.searchsorted(dst_s, tile_bounds[:-1], side='left').astype(jnp.int32)
    seg_end = jnp.searchsorted(dst_s, tile_bounds[1:], side='left').astype(jnp.int32)
    seg_len = seg_end - seg_start                                     # (n_grid,)
    chunks_per_tile = jnp.maximum((seg_len + tile_e - 1) // tile_e, 1).astype(jnp.int32)
    num_chunks = int(jnp.sum(chunks_per_tile))                        # data-dependent
    chunk_off = jnp.concatenate(
        [jnp.zeros((1,), jnp.int32), jnp.cumsum(chunks_per_tile).astype(jnp.int32)])
    e_tot = num_chunks * tile_e

    chunk_to_ntile = jnp.repeat(jnp.arange(n_grid, dtype=jnp.int32),
                                chunks_per_tile, total_repeat_length=num_chunks)
    chunk_is_first = jnp.zeros((num_chunks,), jnp.int32).at[chunk_off[:-1]].set(1)
    chunk_is_last = jnp.zeros((num_chunks,), jnp.int32).at[chunk_off[1:] - 1].set(1)

    r = jnp.arange(e_tot, dtype=jnp.int32)
    t_of_r = chunk_to_ntile[r // tile_e]
    local = r - chunk_off[t_of_r] * tile_e
    valid = local < seg_len[t_of_r]
    orig = jnp.clip(seg_start[t_of_r] + local, 0, max(E - 1, 0))

    src_pad = jnp.where(valid, src_s[orig], 0).astype(jnp.int32)       # (e_tot,)
    dst_loc = jnp.where(valid, dst_s[orig] - t_of_r * tile_n,
                        -1).astype(jnp.int32).reshape(num_chunks, 1, tile_e)
    norm_pad = jnp.where(valid, norm_s[orig], 0.0).reshape(e_tot, 1)
    edge_pad = jnp.where(valid[:, None], edge_s[orig], 0.0)            # (e_tot, din_e)

    vmem_limit = 64 * 1024 * 1024

    # ---- 1) node projection + residual term ----------------------------------
    h_node, resid = pl.pallas_call(
        _node_proj_kernel,
        out_shape=(jax.ShapeDtypeStruct((n_pad, f_pad), f32),
                   jax.ShapeDtypeStruct((n_pad, f_pad), f32)),
        grid_spec=pltpu.PrefetchScalarGridSpec(
            num_scalar_prefetch=0,
            grid=(n_grid,),
            in_specs=[pl.BlockSpec((tile_n, din_n), lambda i: (i, 0)),
                      pl.BlockSpec((din_n, f_pad), lambda i: (0, 0)),
                      pl.BlockSpec((1, f_pad), lambda i: (0, 0)),
                      pl.BlockSpec((1, f_pad), lambda i: (0, 0)),
                      pl.BlockSpec((tile_n, 1), lambda i: (i, 0))],
            out_specs=[pl.BlockSpec((tile_n, f_pad), lambda i: (i, 0)),
                       pl.BlockSpec((tile_n, f_pad), lambda i: (i, 0))]),
        compiler_params=pltpu.CompilerParams(
            dimension_semantics=("parallel",),
            vmem_limit_bytes=vmem_limit),
    )(node_p, wn, bn, rw, inv_deg)

    # ---- 2) fused edge message + segment scatter-add + residual --------------
    kernel2 = functools.partial(_msg_aggregate_kernel, compute_dtype=compute_dtype)
    out = pl.pallas_call(
        kernel2,
        out_shape=jax.ShapeDtypeStruct((n_pad, f_pad), f32),
        grid_spec=pltpu.PrefetchScalarGridSpec(
            num_scalar_prefetch=4,    # chunk_to_ntile, is_first, is_last, src
            grid=(num_chunks,),
            in_specs=[
                # full h_node resident in VMEM (constant block index -> revisited)
                pl.BlockSpec((n_pad, f_pad), lambda c, ct, cf, cl, sp: (0, 0)),
                pl.BlockSpec((tile_e, din_e), lambda c, ct, cf, cl, sp: (c, 0)),
                pl.BlockSpec((1, 1, tile_e), lambda c, ct, cf, cl, sp: (c, 0, 0)),
                pl.BlockSpec((tile_e, 1), lambda c, ct, cf, cl, sp: (c, 0)),
                pl.BlockSpec((tile_n, f_pad), lambda c, ct, cf, cl, sp: (ct[c], 0)),
                pl.BlockSpec((din_e, f_pad), lambda c, ct, cf, cl, sp: (0, 0)),
                pl.BlockSpec((1, f_pad), lambda c, ct, cf, cl, sp: (0, 0)),
            ],
            out_specs=pl.BlockSpec((tile_n, f_pad),
                                   lambda c, ct, cf, cl, sp: (ct[c], 0)),
            scratch_shapes=[pltpu.VMEM((tile_n, f_pad), jnp.float32),
                            pltpu.VMEM((tile_e, f_pad), jnp.float32)]),
        compiler_params=pltpu.CompilerParams(
            dimension_semantics=("arbitrary",),
            vmem_limit_bytes=vmem_limit),
    )(chunk_to_ntile, chunk_is_first, chunk_is_last, src_pad,
      h_node, edge_pad, dst_loc, norm_pad, resid, we, be)

    return out[:N, :F]


def _reference(node_feats, edge_feats, src, dst, degs, norm,
               w_node, b_node, w_edge, b_edge, res_weight):
    """Pure-JAX reference mirroring the PyTorch/DGL forward."""
    h_node = node_feats @ w_node + b_node
    h_edge = edge_feats @ w_edge + b_edge
    e = jax.nn.relu(h_node[src] + h_edge)
    e = norm * e
    agg = jnp.zeros_like(h_node).at[dst].add(e)
    residual = jax.nn.relu(h_node + res_weight.reshape(1, -1)) / degs
    return agg + residual


if __name__ == "__main__":
    key = jax.random.PRNGKey(0)
    N, E = 64, 256
    in_node_feats, in_edge_feats, out_feats = 16, 12, 32

    ks = jax.random.split(key, 8)
    node_feats = jax.random.normal(ks[0], (N, in_node_feats), jnp.float32)
    edge_feats = jax.random.normal(ks[1], (E, in_edge_feats), jnp.float32)
    src = jax.random.randint(ks[2], (E,), 0, N, dtype=jnp.int32)
    dst = jax.random.randint(ks[3], (E,), 0, N, dtype=jnp.int32)

    # degree / norm as the DGL caller would supply them
    in_deg = jnp.zeros((N,), jnp.float32).at[dst].add(1.0)
    degs = jnp.maximum(in_deg, 1.0).reshape(N, 1)
    norm = (1.0 / jnp.sqrt(degs[src, 0] * degs[dst, 0])).reshape(E, 1)

    # deterministic parameter init (nn.Linear-style uniform, Embedding-style normal)
    def lin_init(k, fan_in, fan_out):
        kw, kb = jax.random.split(k)
        bound = 1.0 / float(jnp.sqrt(jnp.float32(fan_in)))
        w = jax.random.uniform(kw, (fan_in, fan_out), jnp.float32, -bound, bound)
        b = jax.random.uniform(kb, (fan_out,), jnp.float32, -bound, bound)
        return w, b

    w_node, b_node = lin_init(ks[4], in_node_feats, out_feats)
    w_edge, b_edge = lin_init(ks[5], in_edge_feats, out_feats)
    res_weight = jax.random.normal(ks[6], (1, out_feats), jnp.float32)

    ref = _reference(node_feats, edge_feats, src, dst, degs, norm,
                     w_node, b_node, w_edge, b_edge, res_weight)

    # f32 path (strict check) — small tiles so the demo exercises multi-tile
    # node grid, multiple edge chunks and the chunk->tile scalar-prefetch maps.
    out = gcn_ogb_layer(node_feats, edge_feats, src, dst, degs, norm,
                        w_node, b_node, w_edge, b_edge, res_weight,
                        tile_n=32, tile_e=128, compute_dtype=jnp.float32)
    out = jax.block_until_ready(out)
    assert out.shape == (N, out_feats)
    assert jnp.allclose(out, ref, atol=2e-4, rtol=2e-4), \
        float(jnp.max(jnp.abs(out - ref)))

    # default path: bf16 MXU operands for the scatter matmul (f32 accumulation),
    # default (larger) tiles — loose check.
    out_bf16 = gcn_ogb_layer(node_feats, edge_feats, src, dst, degs, norm,
                             w_node, b_node, w_edge, b_edge, res_weight)
    out_bf16 = jax.block_until_ready(out_bf16)
    assert jnp.allclose(out_bf16, ref, atol=1.5e-1, rtol=1.5e-1), \
        float(jnp.max(jnp.abs(out_bf16 - ref)))

    print("KERNEL_OK")
</pallas_src>

<mosaic_0001>
module attributes {stable_mosaic.version = 11 : i64} {
  func.func @_node_proj_kernel(%arg0: i32, %arg1: memref<32x16xf32, #tpu.memory_space<vmem>>, %arg2: memref<16x128xf32, #tpu.memory_space<vmem>>, %arg3: memref<1x128xf32, #tpu.memory_space<vmem>>, %arg4: memref<1x128xf32, #tpu.memory_space<vmem>>, %arg5: memref<32x1xf32, #tpu.memory_space<vmem>>, %arg6: memref<32x128xf32, #tpu.memory_space<vmem>>, %arg7: memref<32x128xf32, #tpu.memory_space<vmem>>) attributes {dimension_semantics = [#tpu.dimension_semantics<parallel>], iteration_bounds = array<i64: 2>, scalar_prefetch = 0 : i64, scratch_operands = 0 : i64, tpu.core_type = #tpu.core_type<tc>, window_params = [{transform_indices = @transform_0, window_bounds = array<i64: 32, 16>}, {pipeline_mode = #tpu.pipeline_mode<synchronous>, transform_indices = @transform_1, window_bounds = array<i64: 16, 128>}, {pipeline_mode = #tpu.pipeline_mode<synchronous>, transform_indices = @transform_2, window_bounds = array<i64: 1, 128>}, {pipeline_mode = #tpu.pipeline_mode<synchronous>, transform_indices = @transform_3, window_bounds = array<i64: 1, 128>}, {transform_indices = @transform_4, window_bounds = array<i64: 32, 1>}, {transform_indices = @transform_5, window_bounds = array<i64: 32, 128>}, {transform_indices = @transform_6, window_bounds = array<i64: 32, 128>}]} {
    %c0 = arith.constant 0 : index
    %c0_0 = arith.constant 0 : index
    %0 = vector.load %arg1[%c0, %c0_0] : memref<32x16xf32, #tpu.memory_space<vmem>>, vector<32x16xf32>
    %c0_1 = arith.constant 0 : index
    %c0_2 = arith.constant 0 : index
    %1 = vector.load %arg2[%c0_1, %c0_2] : memref<16x128xf32, #tpu.memory_space<vmem>>, vector<16x128xf32>
    %cst = arith.constant dense<0.000000e+00> : vector<32x128xf32>
    %2 = tpu.matmul %0, %1, %cst {dimension_numbers = #tpu.dot_dimension_numbers<[1], [0], [0], [1], [0, 0, 1, 1], [], []>} : vector<32x16xf32>, vector<16x128xf32>, vector<32x128xf32> -> vector<32x128xf32>
    %c0_3 = arith.constant 0 : index
    %c0_4 = arith.constant 0 : index
    %3 = vector.load %arg3[%c0_3, %c0_4] : memref<1x128xf32, #tpu.memory_space<vmem>>, vector<1x128xf32>
    %4 = vector.broadcast %3 : vector<1x128xf32> to vector<32x128xf32>
    %5 = arith.addf %2, %4 : vector<32x128xf32>
    %c0_5 = arith.constant 0 : index
    %c0_6 = arith.constant 0 : index
    %6 = vector.load %arg6[%c0_5, %c0_6] : memref<32x128xf32, #tpu.memory_space<vmem>>, vector<32x128xf32>
    tpu.vector_store %arg6[%c0_5, %c0_6], %5 {strides = array<i32>} : memref<32x128xf32, #tpu.memory_space<vmem>>, vector<32x128xf32>,
    %c0_7 = arith.constant 0 : index
    %c0_8 = arith.constant 0 : index
    %7 = vector.load %arg4[%c0_7, %c0_8] : memref<1x128xf32, #tpu.memory_space<vmem>>, vector<1x128xf32>
    %8 = vector.broadcast %7 : vector<1x128xf32> to vector<32x128xf32>
    %9 = arith.addf %5, %8 : vector<32x128xf32>
    %cst_9 = arith.constant 0.000000e+00 : f32
    %10 = vector.broadcast %cst_9 : f32 to vector<32x128xf32>
    %11 = arith.maximumf %9, %10 : vector<32x128xf32>
    %c0_10 = arith.constant 0 : index
    %c0_11 = arith.constant 0 : index
    %12 = vector.load %arg5[%c0_10, %c0_11] : memref<32x1xf32, #tpu.memory_space<vmem>>, vector<32x1xf32>
    %13 = vector.broadcast %12 : vector<32x1xf32> to vector<32x128xf32>
    %14 = arith.mulf %11, %13 : vector<32x128xf32>
    %c0_12 = arith.constant 0 : index
    %c0_13 = arith.constant 0 : index
    %15 = vector.load %arg7[%c0_12, %c0_13] : memref<32x128xf32, #tpu.memory_space<vmem>>, vector<32x128xf32>
    tpu.vector_store %arg7[%c0_12, %c0_13], %14 {strides = array<i32>} : memref<32x128xf32, #tpu.memory_space<vmem>>, vector<32x128xf32>,
    return
  }
  func.func @transform_0(%arg0: i32) -> (i32, i32) {
    %c0_i32 = arith.constant 0 : i32
    %c0_i32_0 = arith.constant 0 : i32
    return %arg0, %c0_i32 : i32, i32
  }
  func.func @transform_1(%arg0: i32) -> (i32, i32) {
    %c0_i32 = arith.constant 0 : i32
    %c0_i32_0 = arith.constant 0 : i32
    %c0_i32_1 = arith.constant 0 : i32
    return %c0_i32, %c0_i32_0 : i32, i32
  }
  func.func @transform_2(%arg0: i32) -> (i32, i32) {
    %c0_i32 = arith.constant 0 : i32
    %c0_i32_0 = arith.constant 0 : i32
    %c0_i32_1 = arith.constant 0 : i32
    return %c0_i32, %c0_i32_0 : i32, i32
  }
  func.func @transform_3(%arg0: i32) -> (i32, i32) {
    %c0_i32 = arith.constant 0 : i32
    %c0_i32_0 = arith.constant 0 : i32
    %c0_i32_1 = arith.constant 0 : i32
    return %c0_i32, %c0_i32_0 : i32, i32
  }
  func.func @transform_4(%arg0: i32) -> (i32, i32) {
    %c0_i32 = arith.constant 0 : i32
    %c0_i32_0 = arith.constant 0 : i32
    return %arg0, %c0_i32 : i32, i32
  }
  func.func @transform_5(%arg0: i32) -> (i32, i32) {
    %c0_i32 = arith.constant 0 : i32
    %c0_i32_0 = arith.constant 0 : i32
    return %arg0, %c0_i32 : i32, i32
  }
  func.func @transform_6(%arg0: i32) -> (i32, i32) {
    %c0_i32 = arith.constant 0 : i32
    %c0_i32_0 = arith.constant 0 : i32
    return %arg0, %c0_i32 : i32, i32
  }
}

</mosaic_0001>

<llo_original>
// kernel: tpu_custom_call.1
$region0: #{tpu_custom_call.1}
  #allocation0 [shape = 'u32[]', space=smem, size = 0x4, offset = 0x4, fixed_abs, tag = 'smem constant byte address 0x4 - core index']
  #allocation1 [shape = 'u32[144,128]{1,0:T(1,128)}', space=vmem, size = 0x12000, scoped, tag = 'internal scratch']
  %s0 = inlined_call_operand.vmem [shape: f32[64,16], index: 0, kind: input, shape index: {}]
  %s1 = inlined_call_operand.vmem [shape: f32[16,128], index: 1, kind: input, shape index: {}]
  %s2 = inlined_call_operand.vmem [shape: f32[1,128], index: 2, kind: input, shape index: {}]
  %s3 = inlined_call_operand.vmem [shape: f32[1,128], index: 3, kind: input, shape index: {}]
  %s4 = inlined_call_operand.vmem [shape: f32[64,1], index: 4, kind: input, shape index: {}]
  %s5 = inlined_call_operand.hbm [shape: f32[64,128], index: 5, kind: output, shape index: {0}]
  %s6 = inlined_call_operand.hbm [shape: f32[64,128], index: 6, kind: output, shape index: {1}]
  %7 = xla_tuple %s5, %s6
  %s8 = sld [smem:[#allocation0]]
  $region61: #{tpu_custom_call.1} parent=0
    _
  %s10 = ssub.s32 1, %s8
  %s11 = scalar_select 0, %s10, %s8
  $region1: #{tpu_custom_call.1} parent=0
    #allocation2 [shape = 'u8[32768]{0}', space=vmem, size = 0x8000, scoped, tag = 'output window, operand 0']
    #allocation3 [shape = 's32[2]{0}', space=sflag, size = 0x8, scoped, tag = 'scoped memory for tpu_custom_call.1']
    #allocation4 [shape = 'u8[32768]{0}', space=vmem, size = 0x8000, scoped, tag = 'output window, operand 1']
    #allocation5 [shape = 's32[2]{0}', space=sflag, size = 0x8, scoped, tag = 'scoped memory for tpu_custom_call.1']
    %12 = vsyncpa [#allocation3], 0
    %s13 = scalar_lea.sflag [#allocation3], 1
    %14 = vsyncpa %s13, 0
    %15 = vsyncpa [#allocation5], 0
    %s16 = scalar_lea.sflag [#allocation5], 1
    %17 = vsyncpa %s16, 0
    loop: start=0, step=1, limit=4
    $region2: #{tpu_custom_call.1} parent=1 // loop_pre_header
      _
    $region3: #{tpu_custom_call.1} parent=1 // loop_header
      %s19 = sphi 0, %s23
      %p20 = scmp.ge.s32.totalorder %s19, 4
      %s29 = sphi 0, %s31
      %s32 = sphi 0, %s29
      %s33 = sphi 0, %s32
      %s49 = sphi 0, %s33
      %s53 = sphi 0, %s53
      %s55 = sphi 0, %s53
      %s56 = sphi 0, %s55
      %s70 = sphi 0, %s56
      %s74 = sphi 0, %s74
      %s76 = sphi 0, %s74
      %s77 = sphi 0, %s76
      %s91 = sphi 0, %s77
      %s95 = sphi 0, %s95
      %s97 = sphi 0, %s95
      %s98 = sphi 0, %s97
      %s112 = sphi 0, %s98
      %s118 = sphi 0, %s120
      %s121 = sphi 0, %s118
      %s122 = sphi 0, %s121
      %s138 = sphi 0, %s122
      %s144 = sphi 0, %s146
      %s147 = sphi 0, %s144
      %s148 = sphi 0, %s147
      %s164 = sphi 0, %s148
      %s170 = sphi 0, %s172
      %s173 = sphi 0, %s170
      %s174 = sphi 0, %s173
      %s190 = sphi 0, %s174
    $region4: #{tpu_custom_call.1} parent=1 // loop_header_branch
      %22 = sbr.rel (%p20) target = $region8
    $region5: #{tpu_custom_call.1} parent=1 // loop_body
      %s24 = ssub.s32 %s19, 1
      %s25 = ssub.s32 %s19, 2
      %s26 = sadd.s32 %s19, 1
      %s27 = ssub.s32 %s19, %s26
      %p28 = scmp.eq.s32.totalorder %s27, 0
      %s30 = sadd.s32 %s29, 1
      %s31 = scalar_select %p28, %s29, %s30
      %p34 = pneg %p28
      %p35 = scmp.eq.s32.totalorder %s19, 1
      %p36 = por %p34, %p35
      %p37 = scmp.ne.s32.totalorder %s29, %s32
      %p38 = scmp.eq.s32.totalorder %s19, 0
      %p39 = por %p37, %p38
      %p40 = scmp.ne.s32.totalorder %s29, %s32
      %p41 = scmp.eq.s32.totalorder %s24, 1
      %p42 = por %p40, %p41
      %p43 = scmp.ne.s32.totalorder %s32, %s33
      %p44 = scmp.eq.s32.totalorder %s24, 0
      %p45 = por %p43, %p44
      %p46 = scmp.ne.s32.totalorder %s32, %s33
      %p47 = scmp.eq.s32.totalorder %s25, 1
      %p48 = por %p46, %p47
      %p50 = scmp.ne.s32.totalorder %s33, %s49
      %p51 = scmp.eq.s32.totalorder %s25, 0
      %p52 = por %p50, %p51
      %s54 = sadd.s32 %s53, 1
      %p57 = scmp.eq.s32.totalorder %s19, 1
      %p58 = scmp.ne.s32.totalorder %s53, %s55
      %p59 = scmp.eq.s32.totalorder %s19, 0
      %p60 = por %p58, %p59
      %p61 = scmp.ne.s32.totalorder %s53, %s55
      %p62 = scmp.eq.s32.totalorder %s24, 1
      %p63 = por %p61, %p62
      %p64 = scmp.ne.s32.totalorder %s55, %s56
      %p65 = scmp.eq.s32.totalorder %s24, 0
      %p66 = por %p64, %p65
      %p67 = scmp.ne.s32.totalorder %s55, %s56
      %p68 = scmp.eq.s32.totalorder %s25, 1
      %p69 = por %p67, %p68
      %p71 = scmp.ne.s32.totalorder %s56, %s70
      %p72 = scmp.eq.s32.totalorder %s25, 0
      %p73 = por %p71, %p72
      %s75 = sadd.s32 %s74, 1
      %p78 = scmp.eq.s32.totalorder %s19, 1
      %p79 = scmp.ne.s32.totalorder %s74, %s76
      %p80 = scmp.eq.s32.totalorder %s19, 0
      %p81 = por %p79, %p80
      %p82 = scmp.ne.s32.totalorder %s74, %s76
      %p83 = scmp.eq.s32.totalorder %s24, 1
      %p84 = por %p82, %p83
      %p85 = scmp.ne.s32.totalorder %s76, %s77
      %p86 = scmp.eq.s32.totalorder %s24, 0
      %p87 = por %p85, %p86
      %p88 = scmp.ne.s32.totalorder %s76, %s77
      %p89 = scmp.eq.s32.totalorder %s25, 1
      %p90 = por %p88, %p89
      %p92 = scmp.ne.s32.totalorder %s77, %s91
      %p93 = scmp.eq.s32.totalorder %s25, 0
      %p94 = por %p92, %p93
      %s96 = sadd.s32 %s95, 1
      %p99 = scmp.eq.s32.totalorder %s19, 1
      %p100 = scmp.ne.s32.totalorder %s95, %s97
      %p101 = scmp.eq.s32.totalorder %s19, 0
      %p102 = por %p100, %p101
      %p103 = scmp.ne.s32.totalorder %s95, %s97
      %p104 = scmp.eq.s32.totalorder %s24, 1
      %p105 = por %p103, %p104
      %p106 = scmp.ne.s32.totalorder %s97, %s98
      %p107 = scmp.eq.s32.totalorder %s24, 0
      %p108 = por %p106, %p107
      %p109 = scmp.ne.s32.totalorder %s97, %s98
      %p110 = scmp.eq.s32.totalorder %s25, 1
      %p111 = por %p109, %p110
      %p113 = scmp.ne.s32.totalorder %s98, %s112
      %p114 = scmp.eq.s32.totalorder %s25, 0
      %p115 = por %p113, %p114
      %s116 = ssub.s32 %s19, %s26
      %p117 = scmp.eq.s32.totalorder %s116, 0
      %s119 = sadd.s32 %s118, 1
      %s120 = scalar_select %p117, %s118, %s119
      %p123 = pneg %p117
      %p124 = scmp.eq.s32.totalorder %s19, 1
      %p125 = por %p123, %p124
      %p126 = scmp.ne.s32.totalorder %s118, %s121
      %p127 = scmp.eq.s32.totalorder %s19, 0
      %p128 = por %p126, %p127
      %p129 = scmp.ne.s32.totalorder %s118, %s121
      %p130 = scmp.eq.s32.totalorder %s24, 1
      %p131 = por %p129, %p130
      %p132 = scmp.ne.s32.totalorder %s121, %s122
      %p133 = scmp.eq.s32.totalorder %s24, 0
      %p134 = por %p132, %p133
      %p135 = scmp.ne.s32.totalorder %s121, %s122
      %p136 = scmp.eq.s32.totalorder %s25, 1
      %p137 = por %p135, %p136
      %p139 = scmp.ne.s32.totalorder %s122, %s138
      %p140 = scmp.eq.s32.totalorder %s25, 0
      %p141 = por %p139, %p140
      %s142 = ssub.s32 %s19, %s26
      %p143 = scmp.eq.s32.totalorder %s142, 0
      %s145 = sadd.s32 %s144, 1
      %s146 = scalar_select %p143, %s144, %s145
      %p149 = pneg %p143
      %p150 = scmp.eq.s32.totalorder %s19, 1
      %p151 = por %p149, %p150
      %p152 = scmp.ne.s32.totalorder %s144, %s147
      %p153 = scmp.eq.s32.totalorder %s19, 0
      %p154 = por %p152, %p153
      %p155 = scmp.ne.s32.totalorder %s144, %s147
      %p156 = scmp.eq.s32.totalorder %s24, 1
      %p157 = por %p155, %p156
      %p158 = scmp.ne.s32.totalorder %s147, %s148
      %p159 = scmp.eq.s32.totalorder %s24, 0
      %p160 = por %p158, %p159
      %p161 = scmp.ne.s32.totalorder %s147, %s148
      %p162 = scmp.eq.s32.totalorder %s25, 1
      %p163 = por %p161, %p162
      %p165 = scmp.ne.s32.totalorder %s148, %s164
      %p166 = scmp.eq.s32.totalorder %s25, 0
      %p167 = por %p165, %p166
      %s168 = ssub.s32 %s19, %s26
      %p169 = scmp.eq.s32.totalorder %s168, 0
      %s171 = sadd.s32 %s170, 1
      %s172 = scalar_select %p169, %s170, %s171
      %p175 = pneg %p169
      %p176 = scmp.eq.s32.totalorder %s19, 1
      %p177 = por %p175, %p176
      %p178 = scmp.ne.s32.totalorder %s170, %s173
      %p179 = scmp.eq.s32.totalorder %s19, 0
      %p180 = por %p178, %p179
      %p181 = scmp.ne.s32.totalorder %s170, %s173
      %p182 = scmp.eq.s32.totalorder %s24, 1
      %p183 = por %p181, %p182
      %p184 = scmp.ne.s32.totalorder %s173, %s174
      %p185 = scmp.eq.s32.totalorder %s24, 0
      %p186 = por %p184, %p185
      %p187 = scmp.ne.s32.totalorder %s173, %s174
      %p188 = scmp.eq.s32.totalorder %s25, 1
      %p189 = por %p187, %p188
      %p191 = scmp.ne.s32.totalorder %s174, %s190
      %p192 = scmp.eq.s32.totalorder %s25, 0
      %p193 = por %p191, %p192
      %p194 = scmp.le.s32.totalorder 1, %s19
      %p195 = scmp.lt.s32.totalorder %s19, 3
      %p196 = pnand %p194, %p195
      %p197 = pneg %p196
      // Predicated region
      $region9: #{tpu_custom_call.1} parent=5 // pred_check
        _
      $region10: #{tpu_custom_call.1} parent=5 // pred_check_branch
        %199 = sbr.rel (%p196) target = $region12
      $region11: #{tpu_custom_call.1} parent=5 // pred_region
        %s200 = ssub.s32 %s19, 1
        // Predicated region
        $region13: #{tpu_custom_call.1} parent=11 // pred_check
          %p201 = pneg %p66
        $region14: #{tpu_custom_call.1} parent=11 // pred_check_branch
          %203 = sbr.rel (%p201) target = $region16
        $region15: #{tpu_custom_call.1} parent=11 // pred_region
          _
        $region16: #{tpu_custom_call.1} parent=11 // pred_fallthru
          _
        // Predicated region
        $region17: #{tpu_custom_call.1} parent=11 // pred_check
          %p204 = pneg %p87
        $region18: #{tpu_custom_call.1} parent=11 // pred_check_branch
          %206 = sbr.rel (%p204) target = $region20
        $region19: #{tpu_custom_call.1} parent=11 // pred_region
          _
        $region20: #{tpu_custom_call.1} parent=11 // pred_fallthru
          _
        // Predicated region
        $region21: #{tpu_custom_call.1} parent=11 // pred_check
          %p207 = pneg %p108
        $region22: #{tpu_custom_call.1} parent=11 // pred_check_branch
          %209 = sbr.rel (%p207) target = $region24
        $region23: #{tpu_custom_call.1} parent=11 // pred_region
          _
        $region24: #{tpu_custom_call.1} parent=11 // pred_fallthru
          _
      $region12: #{tpu_custom_call.1} parent=5 // pred_fallthru
        _
      %p210 = scmp.lt.s32.totalorder %s19, 2
      // Predicated region
      $region25: #{tpu_custom_call.1} parent=5 // pred_check
        %p211 = pneg %p210
      $region26: #{tpu_custom_call.1} parent=5 // pred_check_branch
        %213 = sbr.rel (%p211) target = $region28
      $region27: #{tpu_custom_call.1} parent=5 // pred_region
        // Predicated region
        $region29: #{tpu_custom_call.1} parent=27 // pred_check
          %p214 = pneg %p39
        $region30: #{tpu_custom_call.1} parent=27 // pred_check_branch
          %216 = sbr.rel (%p214) target = $region32
        $region31: #{tpu_custom_call.1} parent=27 // pred_region
          %s217 = smul.u32 4, %s19
          %p218 = scmp.lt.s32.totalorder %s217, 7
          %s219 = scalar_select %p218, %s217, 7
          %s220 = smul.addr %s219, 8
          %s221 = scalar_lea.vmem %s0, %s220
          %s222 = smul.u32 4, %s19
        $region32: #{tpu_custom_call.1} parent=27 // pred_fallthru
          _
        // Predicated region
        $region33: #{tpu_custom_call.1} parent=27 // pred_check
          %p223 = pneg %p128
        $region34: #{tpu_custom_call.1} parent=27 // pred_check_branch
          %225 = sbr.rel (%p223) target = $region36
        $region35: #{tpu_custom_call.1} parent=27 // pred_region
          %s226 = smul.u32 4, %s19
          %p227 = scmp.lt.s32.totalorder %s226, 7
          %s228 = scalar_select %p227, %s226, 7
          %s229 = smul.addr %s228, 8
          %s230 = scalar_lea.vmem %s4, %s229
          %s231 = smul.u32 4, %s19
        $region36: #{tpu_custom_call.1} parent=27 // pred_fallthru
          _
      $region28: #{tpu_custom_call.1} parent=5 // pred_fallthru
        _
      %p232 = scmp.le.s32.totalorder 1, %s19
      %p233 = scmp.lt.s32.totalorder %s19, 3
      %p234 = pnand %p232, %p233
      %p235 = pneg %p234
      // Predicated region
      $region37: #{tpu_custom_call.1} parent=5 // pred_check
        _
      $region38: #{tpu_custom_call.1} parent=5 // pred_check_branch
        %237 = sbr.rel (%p234) target = $region40
      $region39: #{tpu_custom_call.1} parent=5 // pred_region
        %s238 = ssub.s32 %s19, 1
        %s239 = smul.u32 4, %s24
        %p240 = scmp.lt.s32.totalorder %s239, 7
        %s241 = scalar_select %p240, %s239, 7
        %s242 = smul.addr %s241, 8
        %s243 = scalar_lea.vmem %s0, %s242
        %p244 = pneg %p45
        %p245 = pneg %p42
        %p246 = pneg %p66
        %p247 = pneg %p63
        %p248 = pneg %p87
        %p249 = pneg %p84
        %p250 = pneg %p108
        %p251 = pneg %p105
        %s252 = smul.u32 4, %s24
        %p253 = scmp.lt.s32.totalorder %s252, 7
        %s254 = scalar_select %p253, %s252, 7
        %s255 = smul.addr %s254, 8
        %s256 = scalar_lea.vmem %s4, %s255
        %p257 = pneg %p134
        %p258 = pneg %p131
        %p259 = pneg %p160
        %p260 = pneg %p157
        %s261 = sand.u32 %s147, 1
        %s262 = scalar_lea.sflag [#allocation3], %s261
        %s263 = sand.u32 %s147, 1
        %s264 = smul.addr %s263, 32
        %s265 = scalar_lea.vmem [#allocation2], %s264
        %p266 = pneg %p186
        %p267 = pneg %p183
        %s268 = sand.u32 %s173, 1
        %s269 = scalar_lea.sflag [#allocation5], %s268
        %s270 = sand.u32 %s173, 1
        %s271 = smul.addr %s270, 32
        %s272 = scalar_lea.vmem [#allocation4], %s271
        %s273 = smul.u32 4, %s24
        %p274 = scmp.lt.s32.totalorder %s273, 7
        %s275 = scalar_select %p274, %s273, 7
        %s276 = smul.addr %s275, 8
        %s277 = scalar_lea.vmem %s0, %s276
        %s278 = smul.u32 4, %s24
        %s279 = smul.u32 4, %s24
        %p280 = scmp.lt.s32.totalorder %s279, 7
        %s281 = scalar_select %p280, %s279, 7
        %s282 = smul.addr %s281, 8
        %s283 = scalar_lea.vmem %s4, %s282
        %s284 = smul.u32 4, %s24
        %s285 = smul.u32 4, %s24
        %s286 = smul.u32 4, %s24
        %v287 = vld [vmem:[%s277] sm:$0xff]
        %v288 = vld [vmem:[%s277 + $0x8] sm:$0xff]
        %v289 = vld [vmem:[%s277 + $0x10] sm:$0xff]
        %v290 = vld [vmem:[%s277 + $0x18] sm:$0xff]
        %v291 = vld [vmem:[%s1] sm:$0xff]
        %v292 = vld [vmem:[%s1 + $0x8] sm:$0xff]
        %v293 = vld [vmem:[%s2] sm:$0x1]
        %v295 = vlaneseq
        %v296 = vshrl.u32 %v295, 7
        %v297 = vsub.s32 0, %v296
        %v298 = vrot.slane %v293, %v297
        %vm300 = vcmask 130048
        %v302 = vsel %vm300, %v287, 0
        %v305 = vsel %vm300, %v288, 0
        %v308 = vsel %vm300, %v289, 0
        %v311 = vsel %vm300, %v290, 0
        %313 = vmatprep.subr.mxu0 0.0
        %314 = vmatpush1.msra.mxu0 0.0
        %315 = vmatprep.subr.mxu0 0.0
        %316 = vmatpush1.msra.mxu0 0.0
        %317 = vmatprep.subr.mxu0 0.0
        %318 = vmatpush1.msra.mxu0 0.0
        %319 = vmatprep.subr.mxu0 0.0
        %320 = vmatpush1.msra.mxu0 0.0
        %321 = vmatprep.subr.mxu0 0.0
        %322 = vmatpush1.msra.mxu0 0.0
        %323 = vmatprep.subr.mxu0 0.0
        %324 = vmatpush1.msra.mxu0 0.0
        %325 = vmatprep.subr.mxu0 0.0
        %326 = vmatpush1.msra.mxu0 0.0
        %327 = vmatprep.subr.mxu0 0.0
        %328 = vmatpush1.msra.mxu0 0.0
        %329 = vmatprep.subr.mxu0 0.0
        %330 = vmatpush1.msra.mxu0 0.0
        %331 = vmatprep.subr.mxu0 0.0
        %332 = vmatpush1.msra.mxu0 0.0
        %333 = vmatprep.subr.mxu0 0.0
        %334 = vmatpush1.msra.mxu0 0.0
        %335 = vmatprep.subr.mxu0 0.0
        %336 = vmatpush1.msra.mxu0 0.0
        %337 = vmatprep.subr.mxu0 0.0
        %338 = vmatpush1.msra.mxu0 0.0
        %339 = vmatprep.subr.mxu0 0.0
        %340 = vmatpush1.msra.mxu0 0.0
        %341 = vmatprep.subr.mxu0 0.0
        %342 = vmatpush1.msra.mxu0 %v292
        %343 = vmatprep.subr.mxu0 0.0
        %344 = vmatpush1.msra.mxu0 %v291
        %345 = vmatprep.subr.mxu0 0.0
        %346 = vmatpush2.msra.mxu0 0.0
        %347 = vmatprep.subr.mxu0 0.0
        %348 = vmatpush2.msra.mxu0 0.0
        %349 = vmatprep.subr.mxu0 0.0
        %350 = vmatpush2.msra.mxu0 0.0
        %351 = vmatprep.subr.mxu0 0.0
        %352 = vmatpush2.msra.mxu0 0.0
        %353 = vmatprep.subr.mxu0 0.0
        %354 = vmatpush2.msra.mxu0 0.0
        %355 = vmatprep.subr.mxu0 0.0
        %356 = vmatpush2.msra.mxu0 0.0
        %357 = vmatprep.subr.mxu0 0.0
        %358 = vmatpush2.msra.mxu0 0.0
        %359 = vmatprep.subr.mxu0 0.0
        %360 = vmatpush2.msra.mxu0 0.0
        %361 = vmatprep.subr.mxu0 0.0
        %362 = vmatpush2.msra.mxu0 0.0
        %363 = vmatprep.subr.mxu0 0.0
        %364 = vmatpush2.msra.mxu0 0.0
        %365 = vmatprep.subr.mxu0 0.0
        %366 = vmatpush2.msra.mxu0 0.0
        %367 = vmatprep.subr.mxu0 0.0
        %368 = vmatpush2.msra.mxu0 0.0
        %369 = vmatprep.subr.mxu0 0.0
        %370 = vmatpush2.msra.mxu0 0.0
        %371 = vmatprep.subr.mxu0 0.0
        %372 = vmatpush2.msra.mxu0 0.0
        %373 = vmatprep.subr.mxu0 0.0
        %374 = vmatpush2.msra.mxu0 0.0
        %375 = vmatprep.subr.mxu0 0.0
        %376 = vmatpush2.msra.mxu0 0.0
        %377 = vmatprep.mubr.f32.mxu0 0.0
        %378 = vmatmul.mubr.f32.gmra.mxu0 %v302
        %v379 = vpop.f32.mrf.mxu0
        %v380 = vadd.f32 %v298, %v379
        %v381 = vpop.f32.mrf.mxu0
        %382 = vmatprep.mubr.f32.mxu0 0.0
        %383 = vmatmul.mubr.f32.gmra.mxu0 %v305
        %v384 = vpop.f32.mrf.mxu0
        %v385 = vadd.f32 %v298, %v384
        %v386 = vpop.f32.mrf.mxu0
        %387 = vmatprep.mubr.f32.mxu0 0.0
        %388 = vmatmul.mubr.f32.gmra.mxu0 %v308
        %v389 = vpop.f32.mrf.mxu0
        %v390 = vadd.f32 %v298, %v389
        %v391 = vpop.f32.mrf.mxu0
        %392 = vmatprep.mubr.f32.mxu0 0.0
        %393 = vmatmul.mubr.f32.gmra.mxu0 %v311
        %v394 = vpop.f32.mrf.mxu0
        %v395 = vadd.f32 %v298, %v394
        %v396 = vpop.f32.mrf.mxu0
        %397 = vdwg.mxu0
        %398 = vst [vmem:[%s265] sm:$0xff] %v380
        %399 = vst [vmem:[%s265 + $0x8] sm:$0xff] %v385
        %400 = vst [vmem:[%s265 + $0x10] sm:$0xff] %v390
        %401 = vst [vmem:[%s265 + $0x18] sm:$0xff] %v395
        %v402 = vld [vmem:[%s3] sm:$0x1]
        %v404 = vlaneseq
        %v405 = vshrl.u32 %v404, 7
        %v406 = vsub.s32 0, %v405
        %v407 = vrot.slane %v402, %v406
        %v409 = vadd.f32 %v380, %v407
        %v410 = vadd.f32 %v385, %v407
        %v411 = vadd.f32 %v390, %v407
        %v412 = vadd.f32 %v395, %v407
        %v413 = vmax.f32 %v409, 0.0
        %v414 = vmax.f32 %v410, 0.0
        %v415 = vmax.f32 %v411, 0.0
        %v416 = vmax.f32 %v412, 0.0
        %v417 = vld [vmem:[%s283] sm:$0xff]
        %v418 = vld [vmem:[%s283 + $0x8] sm:$0xff]
        %v419 = vld [vmem:[%s283 + $0x10] sm:$0xff]
        %v420 = vld [vmem:[%s283 + $0x18] sm:$0xff]
        %422 = vset.pattern.permute.xlu0 0
        %423 = vperm.xlu0 %422, %v417
        %v424 = vpop.permute.xlu0 %423
        %427 = vset.pattern.permute.xlu0 0
        %428 = vperm.xlu0 %427, %v418
        %v429 = vpop.permute.xlu0 %428
        %432 = vset.pattern.permute.xlu0 0
        %433 = vperm.xlu0 %432, %v419
        %v434 = vpop.permute.xlu0 %433
        %437 = vset.pattern.permute.xlu0 0
        %438 = vperm.xlu0 %437, %v420
        %v439 = vpop.permute.xlu0 %438
        %v441 = vmul.f32 %v413, %v424
        %v442 = vmul.f32 %v414, %v429
        %v443 = vmul.f32 %v415, %v434
        %v444 = vmul.f32 %v416, %v439
        %445 = vst [vmem:[%s272] sm:$0xff] %v441
        %446 = vst [vmem:[%s272 + $0x8] sm:$0xff] %v442
        %447 = vst [vmem:[%s272 + $0x10] sm:$0xff] %v443
        %448 = vst [vmem:[%s272 + $0x18] sm:$0xff] %v444
        %s449 = sand.u32 %s147, 1
        %s450 = scalar_lea.sflag [#allocation3], %s449
        %s451 = sand.u32 %s147, 1
        %s452 = smul.addr %s451, 32
        %s453 = scalar_lea.vmem [#allocation2], %s452
        %s454 = sand.u32 %s173, 1
        %s455 = scalar_lea.sflag [#allocation5], %s454
        %s456 = sand.u32 %s173, 1
        %s457 = smul.addr %s456, 32
        %s458 = scalar_lea.vmem [#allocation4], %s457
        // Predicated region
        $region41: #{tpu_custom_call.1} parent=39 // pred_check
          %p459 = pneg %p157
        $region42: #{tpu_custom_call.1} parent=39 // pred_check_branch
          %461 = sbr.rel (%p459) target = $region44
        $region43: #{tpu_custom_call.1} parent=39 // pred_region
          %s462 = smul.u32 4, %s24
          %s464 = ssub.s32 512, 512
          %465 = vsyncadd %s450, %s464
          %s466 = smul.addr %s462, 128
          %s467 = scalar_lea.hbm %s5, %s466
          %s468 = sshll.u32 %s453, 4
          %s469 = int_to_ptr.vmem [resolvable:$true] %s468
          %474 = dma.vmem_to_hbm [thread:$0]  %s469, 512, %s467, %s450, 128, 128, 8
        $region44: #{tpu_custom_call.1} parent=39 // pred_fallthru
          _
        // Predicated region
        $region45: #{tpu_custom_call.1} parent=39 // pred_check
          %p475 = pneg %p183
        $region46: #{tpu_custom_call.1} parent=39 // pred_check_branch
          %477 = sbr.rel (%p475) target = $region48
        $region47: #{tpu_custom_call.1} parent=39 // pred_region
          %s478 = smul.u32 4, %s24
          %s480 = ssub.s32 512, 512
          %481 = vsyncadd %s455, %s480
          %s482 = smul.addr %s478, 128
          %s483 = scalar_lea.hbm %s6, %s482
          %s484 = sshll.u32 %s458, 4
          %s485 = int_to_ptr.vmem [resolvable:$true] %s484
          %490 = dma.vmem_to_hbm [thread:$0]  %s485, 512, %s483, %s455, 128, 128, 8
        $region48: #{tpu_custom_call.1} parent=39 // pred_fallthru
          _
      $region40: #{tpu_custom_call.1} parent=5 // pred_fallthru
        _
      %p491 = scmp.le.s32.totalorder 2, %s19
      // Predicated region
      $region49: #{tpu_custom_call.1} parent=5 // pred_check
        %p492 = pneg %p491
      $region50: #{tpu_custom_call.1} parent=5 // pred_check_branch
        %494 = sbr.rel (%p492) target = $region52
      $region51: #{tpu_custom_call.1} parent=5 // pred_region
        %s495 = ssub.s32 %s19, 2
        // Predicated region
        $region53: #{tpu_custom_call.1} parent=51 // pred_check
          %p496 = pneg %p163
        $region54: #{tpu_custom_call.1} parent=51 // pred_check_branch
          %498 = sbr.rel (%p496) target = $region56
        $region55: #{tpu_custom_call.1} parent=51 // pred_region
          %s499 = sand.u32 %s148, 1
          %s500 = scalar_lea.sflag [#allocation3], %s499
          %s501 = sand.u32 %s148, 1
          %s502 = smul.addr %s501, 32
          %s503 = scalar_lea.vmem [#allocation2], %s502
          %504 = dma.done %s500, 512
        $region56: #{tpu_custom_call.1} parent=51 // pred_fallthru
          _
        // Predicated region
        $region57: #{tpu_custom_call.1} parent=51 // pred_check
          %p505 = pneg %p189
        $region58: #{tpu_custom_call.1} parent=51 // pred_check_branch
          %507 = sbr.rel (%p505) target = $region60
        $region59: #{tpu_custom_call.1} parent=51 // pred_region
          %s508 = sand.u32 %s174, 1
          %s509 = scalar_lea.sflag [#allocation5], %s508
          %s510 = sand.u32 %s174, 1
          %s511 = smul.addr %s510, 32
          %s512 = scalar_lea.vmem [#allocation4], %s511
          %513 = dma.done %s509, 512
        $region60: #{tpu_custom_call.1} parent=51 // pred_fallthru
          _
      $region52: #{tpu_custom_call.1} parent=5 // pred_fallthru
        _
    $region6: #{tpu_custom_call.1} parent=1 // loop_footer
      %s23 = sadd.s32 1, %s19
    $region7: #{tpu_custom_call.1} parent=1 // loop_footer_branch
      %18 = sbr.rel target = $region3
    $region8: #{tpu_custom_call.1} parent=1 // loop_exit
      _
    %514 = vsyncpa [#allocation3], 1
    %s515 = scalar_lea.sflag [#allocation3], 1
    %516 = vsyncpa %s515, 1
    %517 = vsyncpa [#allocation5], 1
    %s518 = scalar_lea.sflag [#allocation5], 1
    %519 = vsyncpa %s518, 1

</llo_original>
